<compile_context>
chip_gen: v5e
topology: v5e:2x2
jax: 0.10.0
libtpu: 0.0.40
codegen_flags: <defaults>
</compile_context>

<pallas_src>
import functools

import jax
import jax.numpy as jnp
from jax.experimental import pallas as pl
from jax.experimental.pallas import tpu as pltpu


def _cdiv(a, b):
    return (a + b - 1) // b


def _attn_pool_kernel(x_ref, w_ref, b_ref, o_ref, m_sc, l_sc, acc_sc,
                      *, seq_len, block_s):
    """One (batch-tile, seq-chunk) step of fused attention pooling.

    x_ref: (Bt, Bs, D) VMEM    w_ref: (1, D) VMEM    b_ref: (1,) SMEM
    o_ref: (Bt, D)     VMEM (constant over the S grid axis -> accumulator)
    m_sc:  (Bt, 1) f32  running max        l_sc: (Bt, 1) f32  running denom
    acc_sc:(Bt, D) f32  running weighted sum of rows
    """
    si = pl.program_id(1)
    n_s = pl.num_programs(1)

    @pl.when(si == 0)
    def _init():
        m_sc[...] = jnp.full_like(m_sc, -jnp.inf)
        l_sc[...] = jnp.zeros_like(l_sc)
        acc_sc[...] = jnp.zeros_like(acc_sc)

    x = x_ref[...].astype(jnp.float32)                       # (Bt, Bs, D)
    w = w_ref[...].astype(jnp.float32)                       # (1, D)
    bias = b_ref[0]                                          # scalar (SMEM)

    # Linear(D -> 1): VPU lane-wise multiply + cross-lane reduce (XLU).
    # TODO(synk): if a bundle dump shows the XLU slot binding on v6e/v7x,
    # offload this reduce to the idle MXU (x @ w padded to (D, 128)).
    s = jnp.sum(x * w, axis=-1) + bias                       # (Bt, Bs)

    # Mask padded sequence positions (only emitted when S was padded).
    if seq_len % block_s != 0:
        pos = si * block_s + jax.lax.broadcasted_iota(jnp.int32, s.shape, 1)
        s = jnp.where(pos < seq_len, s, -jnp.inf)

    # Online (flash-style) softmax update.
    m_prev = m_sc[...]                                       # (Bt, 1)
    m_new = jnp.maximum(m_prev, jnp.max(s, axis=-1, keepdims=True))
    alpha = jnp.exp(m_prev - m_new)                          # (Bt, 1)
    p = jnp.exp(s - m_new)                                   # (Bt, Bs)

    l_sc[...] = alpha * l_sc[...] + jnp.sum(p, axis=-1, keepdims=True)
    acc_sc[...] = alpha * acc_sc[...] + jnp.sum(p[:, :, None] * x, axis=1)
    m_sc[...] = m_new

    @pl.when(si == n_s - 1)
    def _finalize():
        # Exact normalization (softmax weights sum to 1 up to rounding).
        o_ref[...] = (acc_sc[...] / l_sc[...]).astype(o_ref.dtype)


def attention_pooling(x, w, b):
    """x: (B, S, D);  w: (D, 1) (x @ w convention);  b: (1,)."""
    B, S, D = x.shape
    dtype_bytes = jnp.dtype(x.dtype).itemsize

    # ---- tile sizing (generation-aware VMEM budget) -------------------------
    # Sequence chunk: cap at 512 so the flash-style scratch bounds VMEM for
    # any S; for small S the whole sequence is one chunk.
    block_s = min(S, 512)
    s_pad = _cdiv(S, block_s) * block_s

    # Batch tile: target ~2 MiB per x chunk (>> the ~0.35 us/step overhead,
    # and with 2x double-buffering + chunk temporaries still well inside the
    # 32 MiB scoped-VMEM default and v7x's 64 MiB physical VMEM).  Keep at
    # least 2 batch steps when possible so v7x megacore can split the
    # "parallel" axis across its two TensorCores.
    target_bytes = 2 * 1024 * 1024
    block_b = max(1, target_bytes // (block_s * D * dtype_bytes))
    block_b = min(block_b, _cdiv(B, 2))
    if block_b >= 8:
        block_b = (block_b // 8) * 8          # sublane-aligned output tile
        b_pad = _cdiv(B, block_b) * block_b
    else:
        block_b = B                           # tiny batch: one full-dim tile
        b_pad = B

    # Zero-pad awkward shapes (padded rows/positions are masked / sliced off).
    if (b_pad, s_pad) != (B, S):
        x = jnp.pad(x, ((0, b_pad - B), (0, s_pad - S), (0, 0)))

    # Transpose the 1-wide weight once on the host: (D, 1) -> (1, D).
    w_row = w.reshape(1, D)

    kernel = functools.partial(_attn_pool_kernel, seq_len=S, block_s=block_s)

    out = pl.pallas_call(
        kernel,
        out_shape=jax.ShapeDtypeStruct((b_pad, D), x.dtype),
        grid_spec=pltpu.PrefetchScalarGridSpec(
            num_scalar_prefetch=0,
            grid=(b_pad // block_b, s_pad // block_s),
            in_specs=[
                pl.BlockSpec((block_b, block_s, D), lambda i, j: (i, j, 0)),
                pl.BlockSpec((1, D), lambda i, j: (0, 0)),
                pl.BlockSpec(memory_space=pltpu.MemorySpace.SMEM),
            ],
            out_specs=pl.BlockSpec((block_b, D), lambda i, j: (i, 0)),
            scratch_shapes=[
                pltpu.VMEM((block_b, 1), jnp.float32),   # running max
                pltpu.VMEM((block_b, 1), jnp.float32),   # running denom
                pltpu.VMEM((block_b, D), jnp.float32),   # running weighted sum
            ],
        ),
        compiler_params=pltpu.CompilerParams(
            dimension_semantics=("parallel", "arbitrary")),
    )(x, w_row, b)

    return out[:B] if b_pad != B else out


if __name__ == "__main__":
    key = jax.random.PRNGKey(0)
    kx, kw, kb = jax.random.split(key, 3)

    # Batch of players x sequence of games x feature dim (lane-dense 128).
    B, S, D = 16, 16, 128
    x = jax.random.normal(kx, (B, S, D), jnp.float32)
    scale = 1.0 / jnp.sqrt(jnp.float32(D))
    w = jax.random.uniform(kw, (D, 1), jnp.float32, -scale, scale)
    b = jax.random.uniform(kb, (1,), jnp.float32, -scale, scale)

    out = attention_pooling(x, w, b)
    out = jax.block_until_ready(out)

    # Pure-JAX reference (PyTorch semantics: softmax over dim=1, sum over dim=1).
    scores = jnp.einsum("bsd,do->bso", x, w) + b               # (B, S, 1)
    attn = jax.nn.softmax(scores, axis=1)
    ref = jnp.sum(attn * x, axis=1)                            # (B, D)

    assert out.shape == (B, D), out.shape
    assert jnp.all(jnp.isfinite(out)), "non-finite output"
    err = float(jnp.max(jnp.abs(out - ref)))
    assert jnp.allclose(out, ref, rtol=5e-3, atol=5e-3), err
    print("KERNEL_OK")
</pallas_src>

<mosaic_0001>
module attributes {stable_mosaic.version = 11 : i64} {
  func.func @_attn_pool_kernel(%arg0: i32, %arg1: i32, %arg2: memref<8x16x128xf32, #tpu.memory_space<vmem>>, %arg3: memref<1x128xf32, #tpu.memory_space<vmem>>, %arg4: memref<1xf32, #tpu.memory_space<smem>>, %arg5: memref<8x128xf32, #tpu.memory_space<vmem>>, %arg6: memref<8x1xf32, #tpu.memory_space<vmem>>, %arg7: memref<8x1xf32, #tpu.memory_space<vmem>>, %arg8: memref<8x128xf32, #tpu.memory_space<vmem>>) attributes {dimension_semantics = [#tpu.dimension_semantics<parallel>, #tpu.dimension_semantics<arbitrary>], iteration_bounds = array<i64: 2, 1>, scalar_prefetch = 0 : i64, scratch_operands = 3 : i64, tpu.core_type = #tpu.core_type<tc>, window_params = [{transform_indices = @transform_0, window_bounds = array<i64: 8, 16, 128>}, {pipeline_mode = #tpu.pipeline_mode<synchronous>, transform_indices = @transform_1, window_bounds = array<i64: 1, 128>}, {transform_indices = @transform_2, window_bounds = array<i64: 1>}, {transform_indices = @transform_3, window_bounds = array<i64: 8, 128>}]} {
    %c0_i32 = arith.constant 0 : i32
    %0 = arith.cmpi eq, %arg1, %c0_i32 : i32
    %1 = arith.extui %0 : i1 to i32
    %c0_i32_0 = arith.constant 0 : i32
    %2 = arith.cmpi ne, %1, %c0_i32_0 : i32
    scf.if %2 {
      %cst_23 = arith.constant 0xFF800000 : f32
      %40 = vector.broadcast %cst_23 : f32 to vector<8x1xf32>
      %c0_24 = arith.constant 0 : index
      %c0_25 = arith.constant 0 : index
      %41 = vector.load %arg6[%c0_24, %c0_25] : memref<8x1xf32, #tpu.memory_space<vmem>>, vector<8x1xf32>
      tpu.vector_store %arg6[%c0_24, %c0_25], %40 {strides = array<i32>} : memref<8x1xf32, #tpu.memory_space<vmem>>, vector<8x1xf32>,
      %cst_26 = arith.constant 0.000000e+00 : f32
      %42 = vector.broadcast %cst_26 : f32 to vector<8x1xf32>
      %c0_27 = arith.constant 0 : index
      %c0_28 = arith.constant 0 : index
      %43 = vector.load %arg7[%c0_27, %c0_28] : memref<8x1xf32, #tpu.memory_space<vmem>>, vector<8x1xf32>
      tpu.vector_store %arg7[%c0_27, %c0_28], %42 {strides = array<i32>} : memref<8x1xf32, #tpu.memory_space<vmem>>, vector<8x1xf32>,
      %cst_29 = arith.constant 0.000000e+00 : f32
      %44 = vector.broadcast %cst_29 : f32 to vector<8x128xf32>
      %c0_30 = arith.constant 0 : index
      %c0_31 = arith.constant 0 : index
      %45 = vector.load %arg8[%c0_30, %c0_31] : memref<8x128xf32, #tpu.memory_space<vmem>>, vector<8x128xf32>
      tpu.vector_store %arg8[%c0_30, %c0_31], %44 {strides = array<i32>} : memref<8x128xf32, #tpu.memory_space<vmem>>, vector<8x128xf32>,
    } else {
    }
    %c0 = arith.constant 0 : index
    %c0_1 = arith.constant 0 : index
    %c0_2 = arith.constant 0 : index
    %3 = vector.load %arg2[%c0, %c0_1, %c0_2] : memref<8x16x128xf32, #tpu.memory_space<vmem>>, vector<8x16x128xf32>
    %c0_3 = arith.constant 0 : index
    %c0_4 = arith.constant 0 : index
    %4 = vector.load %arg3[%c0_3, %c0_4] : memref<1x128xf32, #tpu.memory_space<vmem>>, vector<1x128xf32>
    %c0_5 = arith.constant 0 : index
    %5 = memref.load %arg4[%c0_5] : memref<1xf32, #tpu.memory_space<smem>>
    %6 = vector.shape_cast %4 : vector<1x128xf32> to vector<1x1x128xf32>
    %7 = vector.broadcast %6 : vector<1x1x128xf32> to vector<8x16x128xf32>
    %8 = arith.mulf %3, %7 : vector<8x16x128xf32>
    %cst = arith.constant dense<0.000000e+00> : vector<8x16xf32>
    %9 = vector.multi_reduction <add>, %8, %cst [2] : vector<8x16x128xf32> to vector<8x16xf32>
    %10 = vector.broadcast %5 : f32 to vector<8x16xf32>
    %11 = arith.addf %9, %10 : vector<8x16xf32>
    %c0_6 = arith.constant 0 : index
    %c0_7 = arith.constant 0 : index
    %12 = vector.load %arg6[%c0_6, %c0_7] : memref<8x1xf32, #tpu.memory_space<vmem>>, vector<8x1xf32>
    %cst_8 = arith.constant dense<0xFF800000> : vector<8xf32>
    %13 = vector.multi_reduction <maximumf>, %11, %cst_8 [1] : vector<8x16xf32> to vector<8xf32>
    %14 = vector.shape_cast %13 : vector<8xf32> to vector<8x1xf32>
    %15 = arith.maximumf %12, %14 : vector<8x1xf32>
    %16 = arith.subf %12, %15 : vector<8x1xf32>
    %17 = math.exp %16 : vector<8x1xf32>
    %18 = vector.broadcast %15 : vector<8x1xf32> to vector<8x16xf32>
    %19 = arith.subf %11, %18 : vector<8x16xf32>
    %20 = math.exp %19 : vector<8x16xf32>
    %c0_9 = arith.constant 0 : index
    %c0_10 = arith.constant 0 : index
    %21 = vector.load %arg7[%c0_9, %c0_10] : memref<8x1xf32, #tpu.memory_space<vmem>>, vector<8x1xf32>
    %22 = arith.mulf %17, %21 : vector<8x1xf32>
    %cst_11 = arith.constant dense<0.000000e+00> : vector<8xf32>
    %23 = vector.multi_reduction <add>, %20, %cst_11 [1] : vector<8x16xf32> to vector<8xf32>
    %24 = vector.shape_cast %23 : vector<8xf32> to vector<8x1xf32>
    %25 = arith.addf %22, %24 : vector<8x1xf32>
    %c0_12 = arith.constant 0 : index
    %c0_13 = arith.constant 0 : index
    %26 = vector.load %arg7[%c0_12, %c0_13] : memref<8x1xf32, #tpu.memory_space<vmem>>, vector<8x1xf32>
    tpu.vector_store %arg7[%c0_12, %c0_13], %25 {strides = array<i32>} : memref<8x1xf32, #tpu.memory_space<vmem>>, vector<8x1xf32>,
    %c0_14 = arith.constant 0 : index
    %c0_15 = arith.constant 0 : index
    %27 = vector.load %arg8[%c0_14, %c0_15] : memref<8x128xf32, #tpu.memory_space<vmem>>, vector<8x128xf32>
    %28 = vector.broadcast %17 : vector<8x1xf32> to vector<8x128xf32>
    %29 = arith.mulf %28, %27 : vector<8x128xf32>
    %30 = vector.shape_cast %20 : vector<8x16xf32> to vector<8x16x1xf32>
    %31 = vector.broadcast %30 : vector<8x16x1xf32> to vector<8x16x128xf32>
    %32 = arith.mulf %31, %3 : vector<8x16x128xf32>
    %cst_16 = arith.constant dense<0.000000e+00> : vector<8x128xf32>
    %33 = vector.multi_reduction <add>, %32, %cst_16 [1] : vector<8x16x128xf32> to vector<8x128xf32>
    %34 = arith.addf %29, %33 : vector<8x128xf32>
    %c0_17 = arith.constant 0 : index
    %c0_18 = arith.constant 0 : index
    %35 = vector.load %arg8[%c0_17, %c0_18] : memref<8x128xf32, #tpu.memory_space<vmem>>, vector<8x128xf32>
    tpu.vector_store %arg8[%c0_17, %c0_18], %34 {strides = array<i32>} : memref<8x128xf32, #tpu.memory_space<vmem>>, vector<8x128xf32>,
    %c0_19 = arith.constant 0 : index
    %c0_20 = arith.constant 0 : index
    %36 = vector.load %arg6[%c0_19, %c0_20] : memref<8x1xf32, #tpu.memory_space<vmem>>, vector<8x1xf32>
    tpu.vector_store %arg6[%c0_19, %c0_20], %15 {strides = array<i32>} : memref<8x1xf32, #tpu.memory_space<vmem>>, vector<8x1xf32>,
    %c0_i32_21 = arith.constant 0 : i32
    %37 = arith.cmpi eq, %arg1, %c0_i32_21 : i32
    %38 = arith.extui %37 : i1 to i32
    %c0_i32_22 = arith.constant 0 : i32
    %39 = arith.cmpi ne, %38, %c0_i32_22 : i32
    scf.if %39 {
      %c0_23 = arith.constant 0 : index
      %c0_24 = arith.constant 0 : index
      %40 = vector.load %arg8[%c0_23, %c0_24] : memref<8x128xf32, #tpu.memory_space<vmem>>, vector<8x128xf32>
      %c0_25 = arith.constant 0 : index
      %c0_26 = arith.constant 0 : index
      %41 = vector.load %arg7[%c0_25, %c0_26] : memref<8x1xf32, #tpu.memory_space<vmem>>, vector<8x1xf32>
      %42 = vector.broadcast %41 : vector<8x1xf32> to vector<8x128xf32>
      %43 = arith.divf %40, %42 : vector<8x128xf32>
      %c0_27 = arith.constant 0 : index
      %c0_28 = arith.constant 0 : index
      %44 = vector.load %arg5[%c0_27, %c0_28] : memref<8x128xf32, #tpu.memory_space<vmem>>, vector<8x128xf32>
      tpu.vector_store %arg5[%c0_27, %c0_28], %43 {strides = array<i32>} : memref<8x128xf32, #tpu.memory_space<vmem>>, vector<8x128xf32>,
    } else {
    }
    return
  }
  func.func @transform_0(%arg0: i32, %arg1: i32) -> (i32, i32, i32) {
    %c0_i32 = arith.constant 0 : i32
    %c0_i32_0 = arith.constant 0 : i32
    return %arg0, %arg1, %c0_i32 : i32, i32, i32
  }
  func.func @transform_1(%arg0: i32, %arg1: i32) -> (i32, i32) {
    %c0_i32 = arith.constant 0 : i32
    %c0_i32_0 = arith.constant 0 : i32
    %c0_i32_1 = arith.constant 0 : i32
    return %c0_i32, %c0_i32_0 : i32, i32
  }
  func.func @transform_2(%arg0: i32, %arg1: i32) -> i32 {
    %c0_i32 = arith.constant 0 : i32
    %c0_i32_0 = arith.constant 0 : i32
    return %c0_i32 : i32
  }
  func.func @transform_3(%arg0: i32, %arg1: i32) -> (i32, i32) {
    %c0_i32 = arith.constant 0 : i32
    %c0_i32_0 = arith.constant 0 : i32
    return %arg0, %c0_i32 : i32, i32
  }
}

</mosaic_0001>

<llo_original>
// kernel: tpu_custom_call.1
$region0: #{tpu_custom_call.1}
  #allocation0 [shape = 'u32[]', space=smem, size = 0x4, offset = 0x4, fixed_abs, tag = 'smem constant byte address 0x4 - core index']
  #allocation1 [shape = 'u32[72,128]{1,0:T(1,128)}', space=vmem, size = 0x9000, scoped, tag = 'internal scratch']
  #allocation2 [shape = 'f32[8,1]{1,0:T(8,128)}', space=vmem, size = 0x1000, scoped, tag = 'scratch operand']
  #allocation3 [shape = 'f32[8,1]{1,0:T(8,128)}', space=vmem, size = 0x1000, scoped, tag = 'scratch operand']
  #allocation4 [shape = 'f32[8,128]{1,0:T(8,128)}', space=vmem, size = 0x1000, scoped, tag = 'scratch operand']
  #allocation5 [shape = 'f32[1]{0:T(128)S(6)}', space=smem, size = 0x200, scoped, tag = 'scoped memory for tpu_custom_call.1']
  %s0 = inlined_call_operand.hbm [shape: f32[16,16,128], index: 0, kind: input, shape index: {}]
  %s1 = inlined_call_operand.vmem [shape: f32[1,128], index: 1, kind: input, shape index: {}]
  %s2 = inlined_call_operand.<no memory space> [shape: f32[1], index: 2, kind: input, shape index: {}]
  %s3 = inlined_call_operand.hbm [shape: f32[16,128], index: 3, kind: output, shape index: {}]
  %s4 = sld [smem:[#allocation0]]
  $region57: #{tpu_custom_call.1} parent=0
    _
  %s6 = ssub.s32 1, %s4
  %s7 = scalar_select 0, %s6, %s4
  %8 = sst [smem:[#allocation5]] %s2
  $region1: #{tpu_custom_call.1} parent=0
    #allocation6 [shape = 'u8[131072]{0}', space=vmem, size = 0x20000, scoped, tag = 'input window, operand 0']
    #allocation7 [shape = 's32[2]{0}', space=sflag, size = 0x8, scoped, tag = 'scoped memory for tpu_custom_call.1']
    #allocation8 [shape = 's32[2]{0}', space=sflag, size = 0x8, scoped, tag = 'scoped memory for tpu_custom_call.1']
    #allocation9 [shape = 'u8[8192]{0}', space=vmem, size = 0x2000, scoped, tag = 'output window, operand 0']
    %9 = vsyncpa [#allocation7], 0
    %s10 = scalar_lea.sflag [#allocation7], 1
    %11 = vsyncpa %s10, 0
    %12 = vsyncpa [#allocation8], 0
    %s13 = scalar_lea.sflag [#allocation8], 1
    %14 = vsyncpa %s13, 0
    loop: start=0, step=1, limit=4
    $region2: #{tpu_custom_call.1} parent=1 // loop_pre_header
      _
    $region3: #{tpu_custom_call.1} parent=1 // loop_header
      %s16 = sphi 0, %s20
      %p17 = scmp.ge.s32.totalorder %s16, 4
      %s23 = sphi 0, %s35
      %s24 = sphi 0, %s31
      %s25 = sphi 0, %s23
      %s26 = sphi 0, %s24
      %s27 = sphi 0, %s25
      %s28 = sphi 0, %s26
      %s40 = sphi 0, %s42
      %s43 = sphi 0, %s40
      %s44 = sphi 0, %s43
      %s60 = sphi 0, %s44
      %s64 = sphi 0, %s64
      %s66 = sphi 0, %s64
      %s67 = sphi 0, %s66
      %s81 = sphi 0, %s67
      %s85 = sphi 0, %s85
      %s87 = sphi 0, %s85
      %s88 = sphi 0, %s87
      %s102 = sphi 0, %s88
      %s108 = sphi 0, %s110
      %s111 = sphi 0, %s108
      %s112 = sphi 0, %s111
      %s128 = sphi 0, %s112
    $region4: #{tpu_custom_call.1} parent=1 // loop_header_branch
      %19 = sbr.rel (%p17) target = $region8
    $region5: #{tpu_custom_call.1} parent=1 // loop_body
      %s21 = ssub.s32 %s16, 1
      %s22 = ssub.s32 %s16, 2
      %s29 = sadd.s32 1, %s24
      %p30 = scmp.ge.s32.totalorder %s29, 1
      %s31 = scalar_select %p30, 0, %s29
      %s32 = sadd.s32 1, %s23
      %s33 = scalar_select %p30, %s32, %s23
      %p34 = scmp.ge.s32.totalorder %s33, 2
      %s35 = scalar_select %p34, 0, %s33
      %s36 = ssub.s32 %s23, %s35
      %s37 = ssub.s32 %s24, %s31
      %s38 = sor.u32 %s36, %s37
      %p39 = scmp.eq.s32.totalorder %s38, 0
      %s41 = sadd.s32 %s40, 1
      %s42 = scalar_select %p39, %s40, %s41
      %p45 = pneg %p39
      %p46 = scmp.eq.s32.totalorder %s16, 1
      %p47 = por %p45, %p46
      %p48 = scmp.ne.s32.totalorder %s40, %s43
      %p49 = scmp.eq.s32.totalorder %s16, 0
      %p50 = por %p48, %p49
      %p51 = scmp.ne.s32.totalorder %s40, %s43
      %p52 = scmp.eq.s32.totalorder %s21, 1
      %p53 = por %p51, %p52
      %p54 = scmp.ne.s32.totalorder %s43, %s44
      %p55 = scmp.eq.s32.totalorder %s21, 0
      %p56 = por %p54, %p55
      %p57 = scmp.ne.s32.totalorder %s43, %s44
      %p58 = scmp.eq.s32.totalorder %s22, 1
      %p59 = por %p57, %p58
      %p61 = scmp.ne.s32.totalorder %s44, %s60
      %p62 = scmp.eq.s32.totalorder %s22, 0
      %p63 = por %p61, %p62
      %s65 = sadd.s32 %s64, 1
      %p68 = scmp.eq.s32.totalorder %s16, 1
      %p69 = scmp.ne.s32.totalorder %s64, %s66
      %p70 = scmp.eq.s32.totalorder %s16, 0
      %p71 = por %p69, %p70
      %p72 = scmp.ne.s32.totalorder %s64, %s66
      %p73 = scmp.eq.s32.totalorder %s21, 1
      %p74 = por %p72, %p73
      %p75 = scmp.ne.s32.totalorder %s66, %s67
      %p76 = scmp.eq.s32.totalorder %s21, 0
      %p77 = por %p75, %p76
      %p78 = scmp.ne.s32.totalorder %s66, %s67
      %p79 = scmp.eq.s32.totalorder %s22, 1
      %p80 = por %p78, %p79
      %p82 = scmp.ne.s32.totalorder %s67, %s81
      %p83 = scmp.eq.s32.totalorder %s22, 0
      %p84 = por %p82, %p83
      %s86 = sadd.s32 %s85, 1
      %p89 = scmp.eq.s32.totalorder %s16, 1
      %p90 = scmp.ne.s32.totalorder %s85, %s87
      %p91 = scmp.eq.s32.totalorder %s16, 0
      %p92 = por %p90, %p91
      %p93 = scmp.ne.s32.totalorder %s85, %s87
      %p94 = scmp.eq.s32.totalorder %s21, 1
      %p95 = por %p93, %p94
      %p96 = scmp.ne.s32.totalorder %s87, %s88
      %p97 = scmp.eq.s32.totalorder %s21, 0
      %p98 = por %p96, %p97
      %p99 = scmp.ne.s32.totalorder %s87, %s88
      %p100 = scmp.eq.s32.totalorder %s22, 1
      %p101 = por %p99, %p100
      %p103 = scmp.ne.s32.totalorder %s88, %s102
      %p104 = scmp.eq.s32.totalorder %s22, 0
      %p105 = por %p103, %p104
      %s106 = ssub.s32 %s23, %s35
      %p107 = scmp.eq.s32.totalorder %s106, 0
      %s109 = sadd.s32 %s108, 1
      %s110 = scalar_select %p107, %s108, %s109
      %p113 = pneg %p107
      %p114 = scmp.eq.s32.totalorder %s16, 1
      %p115 = por %p113, %p114
      %p116 = scmp.ne.s32.totalorder %s108, %s111
      %p117 = scmp.eq.s32.totalorder %s16, 0
      %p118 = por %p116, %p117
      %p119 = scmp.ne.s32.totalorder %s108, %s111
      %p120 = scmp.eq.s32.totalorder %s21, 1
      %p121 = por %p119, %p120
      %p122 = scmp.ne.s32.totalorder %s111, %s112
      %p123 = scmp.eq.s32.totalorder %s21, 0
      %p124 = por %p122, %p123
      %p125 = scmp.ne.s32.totalorder %s111, %s112
      %p126 = scmp.eq.s32.totalorder %s22, 1
      %p127 = por %p125, %p126
      %p129 = scmp.ne.s32.totalorder %s112, %s128
      %p130 = scmp.eq.s32.totalorder %s22, 0
      %p131 = por %p129, %p130
      %p132 = scmp.le.s32.totalorder 1, %s16
      %p133 = scmp.lt.s32.totalorder %s16, 3
      %p134 = pnand %p132, %p133
      %p135 = pneg %p134
      // Predicated region
      $region9: #{tpu_custom_call.1} parent=5 // pred_check
        _
      $region10: #{tpu_custom_call.1} parent=5 // pred_check_branch
        %137 = sbr.rel (%p134) target = $region12
      $region11: #{tpu_custom_call.1} parent=5 // pred_region
        %s138 = ssub.s32 %s16, 1
        // Predicated region
        $region13: #{tpu_custom_call.1} parent=11 // pred_check
          %p139 = pneg %p77
        $region14: #{tpu_custom_call.1} parent=11 // pred_check_branch
          %141 = sbr.rel (%p139) target = $region16
        $region15: #{tpu_custom_call.1} parent=11 // pred_region
          _
        $region16: #{tpu_custom_call.1} parent=11 // pred_fallthru
          _
        // Predicated region
        $region17: #{tpu_custom_call.1} parent=11 // pred_check
          %p142 = pneg %p98
        $region18: #{tpu_custom_call.1} parent=11 // pred_check_branch
          %144 = sbr.rel (%p142) target = $region20
        $region19: #{tpu_custom_call.1} parent=11 // pred_region
          _
        $region20: #{tpu_custom_call.1} parent=11 // pred_fallthru
          _
      $region12: #{tpu_custom_call.1} parent=5 // pred_fallthru
        _
      %p145 = scmp.lt.s32.totalorder %s16, 2
      // Predicated region
      $region21: #{tpu_custom_call.1} parent=5 // pred_check
        %p146 = pneg %p145
      $region22: #{tpu_custom_call.1} parent=5 // pred_check_branch
        %148 = sbr.rel (%p146) target = $region24
      $region23: #{tpu_custom_call.1} parent=5 // pred_region
        // Predicated region
        $region25: #{tpu_custom_call.1} parent=23 // pred_check
          %p149 = pneg %p50
        $region26: #{tpu_custom_call.1} parent=23 // pred_check_branch
          %151 = sbr.rel (%p149) target = $region28
        $region27: #{tpu_custom_call.1} parent=23 // pred_region
          %s152 = sand.u32 %s40, 1
          %s153 = scalar_lea.sflag [#allocation7], %s152
          %s154 = sand.u32 %s40, 1
          %s155 = smul.addr %s154, 128
          %s156 = scalar_lea.vmem [#allocation6], %s155
          %s157 = smul.u32 8, %s23
          %s158 = smul.u32 2, %s24
          %160 = vsyncadd %s153, 0
          %s161 = smul.addr %s157, 2
          %s162 = sadd.s32 %s158, %s161
          %s163 = smul.addr %s162, 8
          %s164 = scalar_lea.hbm %s0, %s163
          %s165 = sshll.u32 %s164, 4
          %s166 = int_to_ptr.hbm [resolvable:$true] %s165
          %s167 = sshll.u32 %s156, 4
          %s168 = int_to_ptr.vmem [resolvable:$true] %s167
          %173 = dma.hbm_to_vmem [thread:$0]  %s166, 2048, %s168, %s153, 128, 128, 8
        $region28: #{tpu_custom_call.1} parent=23 // pred_fallthru
          _
      $region24: #{tpu_custom_call.1} parent=5 // pred_fallthru
        _
      %p174 = scmp.le.s32.totalorder 1, %s16
      %p175 = scmp.lt.s32.totalorder %s16, 3
      %p176 = pnand %p174, %p175
      %p177 = pneg %p176
      // Predicated region
      $region29: #{tpu_custom_call.1} parent=5 // pred_check
        _
      $region30: #{tpu_custom_call.1} parent=5 // pred_check_branch
        %179 = sbr.rel (%p176) target = $region32
      $region31: #{tpu_custom_call.1} parent=5 // pred_region
        %s180 = ssub.s32 %s16, 1
        %s181 = sand.u32 %s43, 1
        %s182 = scalar_lea.sflag [#allocation7], %s181
        %s183 = sand.u32 %s43, 1
        %s184 = smul.addr %s183, 128
        %s185 = scalar_lea.vmem [#allocation6], %s184
        // Predicated region
        $region33: #{tpu_custom_call.1} parent=31 // pred_check
          %p186 = pneg %p56
        $region34: #{tpu_custom_call.1} parent=31 // pred_check_branch
          %188 = sbr.rel (%p186) target = $region36
        $region35: #{tpu_custom_call.1} parent=31 // pred_region
          %190 = dma.done %s182, 2048
        $region36: #{tpu_custom_call.1} parent=31 // pred_fallthru
          _
        %s191 = sand.u32 %s43, 1
        %s192 = scalar_lea.sflag [#allocation7], %s191
        %s193 = sand.u32 %s43, 1
        %s194 = smul.addr %s193, 128
        %s195 = scalar_lea.vmem [#allocation6], %s194
        %p196 = pneg %p56
        %p197 = pneg %p53
        %p198 = pneg %p77
        %p199 = pneg %p74
        %p200 = pneg %p98
        %p201 = pneg %p95
        %p202 = pneg %p124
        %p203 = pneg %p121
        %s204 = sand.u32 %s111, 1
        %s205 = scalar_lea.sflag [#allocation8], %s204
        %s206 = sand.u32 %s111, 1
        %s207 = smul.addr %s206, 8
        %s208 = scalar_lea.vmem [#allocation9], %s207
        %s209 = smul.u32 8, %s25
        %s210 = smul.u32 2, %s26
        %p211 = scmp.eq.s32.totalorder %s26, 0
        // Predicated region
        $region37: #{tpu_custom_call.1} parent=31 // pred_check
          %p212 = pneg %p211
        $region38: #{tpu_custom_call.1} parent=31 // pred_check_branch
          %214 = sbr.rel (%p212) target = $region40
        $region39: #{tpu_custom_call.1} parent=31 // pred_region
          %vm215 = vcmask 7168
          %216 = vst.msk [vmem:[#allocation2] sm:$0xff] %vm215, -inf
          %217 = vst.msk [vmem:[#allocation3] sm:$0xff] %vm215, 0.0
          %218 = vst [vmem:[#allocation4] sm:$0xff] 0.0
        $region40: #{tpu_custom_call.1} parent=31 // pred_fallthru
          _
        %v219 = vld [vmem:[%s185] sm:$0xff]
        %v220 = vld [vmem:[%s185 + $0x8] sm:$0xff]
        %v221 = vld [vmem:[%s185 + $0x10] sm:$0xff]
        %v222 = vld [vmem:[%s185 + $0x18] sm:$0xff]
        %v223 = vld [vmem:[%s185 + $0x20] sm:$0xff]
        %v224 = vld [vmem:[%s185 + $0x28] sm:$0xff]
        %v225 = vld [vmem:[%s185 + $0x30] sm:$0xff]
        %v226 = vld [vmem:[%s185 + $0x38] sm:$0xff]
        %v227 = vld [vmem:[%s185 + $0x40] sm:$0xff]
        %v228 = vld [vmem:[%s185 + $0x48] sm:$0xff]
        %v229 = vld [vmem:[%s185 + $0x50] sm:$0xff]
        %v230 = vld [vmem:[%s185 + $0x58] sm:$0xff]
        %v231 = vld [vmem:[%s185 + $0x60] sm:$0xff]
        %v232 = vld [vmem:[%s185 + $0x68] sm:$0xff]
        %v233 = vld [vmem:[%s185 + $0x70] sm:$0xff]
        %v234 = vld [vmem:[%s185 + $0x78] sm:$0xff]
        %v235 = vld [vmem:[%s1] sm:$0x1]
        %s236 = sld [smem:[#allocation5]]
        %v238 = vperm.slane %v235, 0
        %v240 = vmul.f32 %v219, %v238
        %v241 = vmul.f32 %v220, %v238
        %v242 = vmul.f32 %v221, %v238
        %v243 = vmul.f32 %v222, %v238
        %v244 = vmul.f32 %v223, %v238
        %v245 = vmul.f32 %v224, %v238
        %v246 = vmul.f32 %v225, %v238
        %v247 = vmul.f32 %v226, %v238
        %v248 = vmul.f32 %v227, %v238
        %v249 = vmul.f32 %v228, %v238
        %v250 = vmul.f32 %v229, %v238
        %v251 = vmul.f32 %v230, %v238
        %v252 = vmul.f32 %v231, %v238
        %v253 = vmul.f32 %v232, %v238
        %v254 = vmul.f32 %v233, %v238
        %v255 = vmul.f32 %v234, %v238
        %256 = vadd.xlane.f32.xlu0 %v240
        %v257 = vpop.xlane.xlu0 %256
        %258 = vadd.xlane.f32.xlu0 %v241
        %v259 = vpop.xlane.xlu0 %258
        %260 = vadd.xlane.f32.xlu0 %v242
        %v261 = vpop.xlane.xlu0 %260
        %262 = vadd.xlane.f32.xlu0 %v243
        %v263 = vpop.xlane.xlu0 %262
        %264 = vadd.xlane.f32.xlu0 %v244
        %v265 = vpop.xlane.xlu0 %264
        %266 = vadd.xlane.f32.xlu0 %v245
        %v267 = vpop.xlane.xlu0 %266
        %268 = vadd.xlane.f32.xlu0 %v246
        %v269 = vpop.xlane.xlu0 %268
        %270 = vadd.xlane.f32.xlu0 %v247
        %v271 = vpop.xlane.xlu0 %270
        %272 = vadd.xlane.f32.xlu0 %v248
        %v273 = vpop.xlane.xlu0 %272
        %274 = vadd.xlane.f32.xlu0 %v249
        %v275 = vpop.xlane.xlu0 %274
        %276 = vadd.xlane.f32.xlu0 %v250
        %v277 = vpop.xlane.xlu0 %276
        %278 = vadd.xlane.f32.xlu0 %v251
        %v279 = vpop.xlane.xlu0 %278
        %280 = vadd.xlane.f32.xlu0 %v252
        %v281 = vpop.xlane.xlu0 %280
        %282 = vadd.xlane.f32.xlu0 %v253
        %v283 = vpop.xlane.xlu0 %282
        %284 = vadd.xlane.f32.xlu0 %v254
        %v285 = vpop.xlane.xlu0 %284
        %286 = vadd.xlane.f32.xlu0 %v255
        %v287 = vpop.xlane.xlu0 %286
        %v288 = vstv %s236
        %v289 = vadd.f32 %v257, %v288
        %v290 = vadd.f32 %v259, %v288
        %v291 = vadd.f32 %v261, %v288
        %v292 = vadd.f32 %v263, %v288
        %v293 = vadd.f32 %v265, %v288
        %v294 = vadd.f32 %v267, %v288
        %v295 = vadd.f32 %v269, %v288
        %v296 = vadd.f32 %v271, %v288
        %v297 = vadd.f32 %v273, %v288
        %v298 = vadd.f32 %v275, %v288
        %v299 = vadd.f32 %v277, %v288
        %v300 = vadd.f32 %v279, %v288
        %v301 = vadd.f32 %v281, %v288
        %v302 = vadd.f32 %v283, %v288
        %v303 = vadd.f32 %v285, %v288
        %v304 = vadd.f32 %v287, %v288
        %v305 = vld [vmem:[#allocation2] sm:$0xff]
        %v322 = vlaneseq
        %v323 = vand.u32 %v322, 127
        %v324 = vperm.slane %v289, %v323
        %v325 = vadd.s32 %v323, 4294967288
        %v326 = vperm.slane %v290, %v325
        %vm327 = vcmask 130112
        %v328 = vsel %vm327, %v326, %v324
        %v329 = vperm.slane %v291, %v323
        %v330 = vperm.slane %v292, %v325
        %v331 = vsel %vm327, %v330, %v329
        %v332 = vperm.slane %v293, %v323
        %v333 = vperm.slane %v294, %v325
        %v334 = vsel %vm327, %v333, %v332
        %v335 = vperm.slane %v295, %v323
        %v336 = vperm.slane %v296, %v325
        %v337 = vsel %vm327, %v336, %v335
        %v338 = vperm.slane %v297, %v323
        %v339 = vperm.slane %v298, %v325
        %v340 = vsel %vm327, %v339, %v338
        %v341 = vperm.slane %v299, %v323
        %v342 = vperm.slane %v300, %v325
        %v343 = vsel %vm327, %v342, %v341
        %v344 = vperm.slane %v301, %v323
        %v345 = vperm.slane %v302, %v325
        %v346 = vsel %vm327, %v345, %v344
        %v347 = vperm.slane %v303, %v323
        %v348 = vperm.slane %v304, %v325
        %v349 = vsel %vm327, %v348, %v347
        %vm350 = vcmask 1041409
        %v351 = vsel %vm350, %v331, %v328
        %vm352 = vcmask 1042434
        %v353 = vsel %vm352, %v334, %v351
        %vm354 = vcmask 1043459
        %v355 = vsel %vm354, %v337, %v353
        %vm356 = vcmask 1044484
        %v357 = vsel %vm356, %v340, %v355
        %vm358 = vcmask 1045509
        %v359 = vsel %vm358, %v343, %v357
        %vm360 = vcmask 1046534
        %v361 = vsel %vm360, %v346, %v359
        %vm362 = vcmask 1047559
        %v363 = vsel %vm362, %v349, %v361
        %vm365 = vcmask 130048
        %v366 = vsel %vm365, %v363, -inf
        %367 = vmax.xlane.f32.xlu0 %v366
        %v368 = vpop.xlane.xlu0 %367
        %v369 = vmax.f32 %v305, %v368
        %v370 = vsub.f32 %v305, %v369
        %v371 = vmul.f32 %v370, 1.442695
        %v372 = vpow.pop %v371
        %374 = vset.pattern.permute.xlu0 0
        %375 = vperm.xlu0 %374, %v369
        %v376 = vpop.permute.xlu0 %375
        %v377 = vperm.slane %v376, 0
        %v378 = vperm.slane %v376, 1
        %v379 = vperm.slane %v376, 2
        %v380 = vperm.slane %v376, 3
        %v381 = vperm.slane %v376, 4
        %v382 = vperm.slane %v376, 5
        %v383 = vperm.slane %v376, 6
        %v384 = vperm.slane %v376, 7
        %v393 = vsub.f32 %v289, %v377
        %v394 = vsub.f32 %v290, %v377
        %v395 = vsub.f32 %v291, %v378
        %v396 = vsub.f32 %v292, %v378
        %v397 = vsub.f32 %v293, %v379
        %v398 = vsub.f32 %v294, %v379
        %v399 = vsub.f32 %v295, %v380
        %v400 = vsub.f32 %v296, %v380
        %v401 = vsub.f32 %v297, %v381
        %v402 = vsub.f32 %v298, %v381
        %v403 = vsub.f32 %v299, %v382
        %v404 = vsub.f32 %v300, %v382
        %v405 = vsub.f32 %v301, %v383
        %v406 = vsub.f32 %v302, %v383
        %v407 = vsub.f32 %v303, %v384
        %v408 = vsub.f32 %v304, %v384
        %v409 = vmul.f32 %v393, 1.442695
        %v410 = vpow.pop %v409
        %v411 = vmul.f32 %v394, 1.442695
        %v412 = vpow.pop %v411
        %v413 = vmul.f32 %v395, 1.442695
        %v414 = vpow.pop %v413
        %v415 = vmul.f32 %v396, 1.442695
        %v416 = vpow.pop %v415
        %v417 = vmul.f32 %v397, 1.442695
        %v418 = vpow.pop %v417
        %v419 = vmul.f32 %v398, 1.442695
        %v420 = vpow.pop %v419
        %v421 = vmul.f32 %v399, 1.442695
        %v422 = vpow.pop %v421
        %v423 = vmul.f32 %v400, 1.442695
        %v424 = vpow.pop %v423
        %v425 = vmul.f32 %v401, 1.442695
        %v426 = vpow.pop %v425
        %v427 = vmul.f32 %v402, 1.442695
        %v428 = vpow.pop %v427
        %v429 = vmul.f32 %v403, 1.442695
        %v430 = vpow.pop %v429
        %v431 = vmul.f32 %v404, 1.442695
        %v432 = vpow.pop %v431
        %v433 = vmul.f32 %v405, 1.442695
        %v434 = vpow.pop %v433
        %v435 = vmul.f32 %v406, 1.442695
        %v436 = vpow.pop %v435
        %v437 = vmul.f32 %v407, 1.442695
        %v438 = vpow.pop %v437
        %v439 = vmul.f32 %v408, 1.442695
        %v440 = vpow.pop %v439
        %v441 = vld [vmem:[#allocation3] sm:$0xff]
        %v442 = vmul.f32 %v372, %v441
        %459 = vset.pattern.permute.xlu0 0
        %460 = vperm.xlu0 %459, %v410
        %v461 = vpop.permute.xlu0 %460
        %462 = vset.pattern.permute.xlu0 0
        %463 = vperm.xlu0 %462, %v412
        %v464 = vpop.permute.xlu0 %463
        %465 = vset.pattern.permute.xlu0 0
        %466 = vperm.xlu0 %465, %v414
        %v467 = vpop.permute.xlu0 %466
        %468 = vset.pattern.permute.xlu0 0
        %469 = vperm.xlu0 %468, %v416
        %v470 = vpop.permute.xlu0 %469
        %471 = vset.pattern.permute.xlu0 0
        %472 = vperm.xlu0 %471, %v418
        %v473 = vpop.permute.xlu0 %472
        %474 = vset.pattern.permute.xlu0 0
        %475 = vperm.xlu0 %474, %v420
        %v476 = vpop.permute.xlu0 %475
        %477 = vset.pattern.permute.xlu0 0
        %478 = vperm.xlu0 %477, %v422
        %v479 = vpop.permute.xlu0 %478
        %480 = vset.pattern.permute.xlu0 0
        %481 = vperm.xlu0 %480, %v424
        %v482 = vpop.permute.xlu0 %481
        %483 = vset.pattern.permute.xlu0 0
        %484 = vperm.xlu0 %483, %v426
        %v485 = vpop.permute.xlu0 %484
        %486 = vset.pattern.permute.xlu0 0
        %487 = vperm.xlu0 %486, %v428
        %v488 = vpop.permute.xlu0 %487
        %489 = vset.pattern.permute.xlu0 0
        %490 = vperm.xlu0 %489, %v430
        %v491 = vpop.permute.xlu0 %490
        %492 = vset.pattern.permute.xlu0 0
        %493 = vperm.xlu0 %492, %v432
        %v494 = vpop.permute.xlu0 %493
        %495 = vset.pattern.permute.xlu0 0
        %496 = vperm.xlu0 %495, %v434
        %v497 = vpop.permute.xlu0 %496
        %498 = vset.pattern.permute.xlu0 0
        %499 = vperm.xlu0 %498, %v436
        %v500 = vpop.permute.xlu0 %499
        %501 = vset.pattern.permute.xlu0 0
        %502 = vperm.xlu0 %501, %v438
        %v503 = vpop.permute.xlu0 %502
        %504 = vset.pattern.permute.xlu0 0
        %505 = vperm.xlu0 %504, %v440
        %v506 = vpop.permute.xlu0 %505
        %v507 = vperm.slane %v461, %v323
        %v508 = vperm.slane %v464, %v325
        %v509 = vsel %vm327, %v508, %v507
        %v510 = vperm.slane %v467, %v323
        %v511 = vperm.slane %v470, %v325
        %v512 = vsel %vm327, %v511, %v510
        %v513 = vperm.slane %v473, %v323
        %v514 = vperm.slane %v476, %v325
        %v515 = vsel %vm327, %v514, %v513
        %v516 = vperm.slane %v479, %v323
        %v517 = vperm.slane %v482, %v325
        %v518 = vsel %vm327, %v517, %v516
        %v519 = vperm.slane %v485, %v323
        %v520 = vperm.slane %v488, %v325
        %v521 = vsel %vm327, %v520, %v519
        %v522 = vperm.slane %v491, %v323
        %v523 = vperm.slane %v494, %v325
        %v524 = vsel %vm327, %v523, %v522
        %v525 = vperm.slane %v497, %v323
        %v526 = vperm.slane %v500, %v325
        %v527 = vsel %vm327, %v526, %v525
        %v528 = vperm.slane %v503, %v323
        %v529 = vperm.slane %v506, %v325
        %v530 = vsel %vm327, %v529, %v528
        %v531 = vsel %vm350, %v512, %v509
        %v532 = vsel %vm352, %v515, %v531
        %v533 = vsel %vm354, %v518, %v532
        %v534 = vsel %vm356, %v521, %v533
        %v535 = vsel %vm358, %v524, %v534
        %v536 = vsel %vm360, %v527, %v535
        %v537 = vsel %vm362, %v530, %v536
        %v539 = vsel %vm365, %v537, 0.0
        %540 = vadd.xlane.f32.xlu0 %v539
        %v541 = vpop.xlane.xlu0 %540
        %v542 = vadd.f32 %v442, %v541
        %vm543 = vcmask 7168
        %544 = vst.msk [vmem:[#allocation3] sm:$0xff] %vm543, %v542
        %v545 = vld [vmem:[#allocation4] sm:$0xff]
        %547 = vset.pattern.permute.xlu0 0
        %548 = vperm.xlu0 %547, %v372
        %v549 = vpop.permute.xlu0 %548
        %v551 = vmul.f32 %v549, %v545
        %v568 = vmul.f32 %v461, %v219
        %v569 = vmul.f32 %v464, %v220
        %v570 = vmul.f32 %v467, %v221
        %v571 = vmul.f32 %v470, %v222
        %v572 = vmul.f32 %v473, %v223
        %v573 = vmul.f32 %v476, %v224
        %v574 = vmul.f32 %v479, %v225
        %v575 = vmul.f32 %v482, %v226
        %v576 = vmul.f32 %v485, %v227
        %v577 = vmul.f32 %v488, %v228
        %v578 = vmul.f32 %v491, %v229
        %v579 = vmul.f32 %v494, %v230
        %v580 = vmul.f32 %v497, %v231
        %v581 = vmul.f32 %v500, %v232
        %v582 = vmul.f32 %v503, %v233
        %v583 = vmul.f32 %v506, %v234
        %v584 = vadd.f32 %v568, %v569
        %v585 = vrot.slane %v584, 4
        %v586 = vadd.f32 %v584, %v585
        %v587 = vrot.slane %v586, 2
        %v588 = vadd.f32 %v586, %v587
        %v589 = vrot.slane %v588, 1
        %v590 = vadd.f32 %v588, %v589
        %v591 = vadd.f32 %v570, %v571
        %v592 = vrot.slane %v591, 4
        %v593 = vadd.f32 %v591, %v592
        %v594 = vrot.slane %v593, 2
        %v595 = vadd.f32 %v593, %v594
        %v596 = vrot.slane %v595, 1
        %v597 = vadd.f32 %v595, %v596
        %v598 = vadd.f32 %v572, %v573
        %v599 = vrot.slane %v598, 4
        %v600 = vadd.f32 %v598, %v599
        %v601 = vrot.slane %v600, 2
        %v602 = vadd.f32 %v600, %v601
        %v603 = vrot.slane %v602, 1
        %v604 = vadd.f32 %v602, %v603
        %v605 = vadd.f32 %v574, %v575
        %v606 = vrot.slane %v605, 4
        %v607 = vadd.f32 %v605, %v606
        %v608 = vrot.slane %v607, 2
        %v609 = vadd.f32 %v607, %v608
        %v610 = vrot.slane %v609, 1
        %v611 = vadd.f32 %v609, %v610
        %v612 = vadd.f32 %v576, %v577
        %v613 = vrot.slane %v612, 4
        %v614 = vadd.f32 %v612, %v613
        %v615 = vrot.slane %v614, 2
        %v616 = vadd.f32 %v614, %v615
        %v617 = vrot.slane %v616, 1
        %v618 = vadd.f32 %v616, %v617
        %v619 = vadd.f32 %v578, %v579
        %v620 = vrot.slane %v619, 4
        %v621 = vadd.f32 %v619, %v620
        %v622 = vrot.slane %v621, 2
        %v623 = vadd.f32 %v621, %v622
        %v624 = vrot.slane %v623, 1
        %v625 = vadd.f32 %v623, %v624
        %v626 = vadd.f32 %v580, %v581
        %v627 = vrot.slane %v626, 4
        %v628 = vadd.f32 %v626, %v627
        %v629 = vrot.slane %v628, 2
        %v630 = vadd.f32 %v628, %v629
        %v631 = vrot.slane %v630, 1
        %v632 = vadd.f32 %v630, %v631
        %v633 = vadd.f32 %v582, %v583
        %v634 = vrot.slane %v633, 4
        %v635 = vadd.f32 %v633, %v634
        %v636 = vrot.slane %v635, 2
        %v637 = vadd.f32 %v635, %v636
        %v638 = vrot.slane %v637, 1
        %v639 = vadd.f32 %v637, %v638
        %v648 = vsel %vm350, %v597, %v590
        %v649 = vsel %vm352, %v604, %v648
        %v650 = vsel %vm354, %v611, %v649
        %v651 = vsel %vm356, %v618, %v650
        %v652 = vsel %vm358, %v625, %v651
        %v653 = vsel %vm360, %v632, %v652
        %v654 = vsel %vm362, %v639, %v653
        %v656 = vadd.f32 %v551, %v654
        %657 = vst [vmem:[#allocation4] sm:$0xff] %v656
        %658 = vst.msk [vmem:[#allocation2] sm:$0xff] %vm543, %v369
        // Predicated region
        $region41: #{tpu_custom_call.1} parent=31 // pred_check
          %p659 = pneg %p211
        $region42: #{tpu_custom_call.1} parent=31 // pred_check_branch
          %661 = sbr.rel (%p659) target = $region44
        $region43: #{tpu_custom_call.1} parent=31 // pred_region
          %v662 = vld [vmem:[#allocation4] sm:$0xff]
          %v663 = vld [vmem:[#allocation3] sm:$0xff]
          %665 = vset.pattern.permute.xlu0 0
          %666 = vperm.xlu0 %665, %v663
          %v667 = vpop.permute.xlu0 %666
          %v669 = vrcp.pop %v667
          %v670 = vmul.f32 %v667, %v669
          %v671 = vsub.f32 1.0, %v670
          %v672 = vmul.f32 %v669, %v671
          %v673 = vadd.f32 %v669, %v672
          %vm674 = vweird.f32 %v667
          %vm675 = vweird.f32 %v669
          %vm676 = vmor %vm674, %vm675
          %v677 = vsel %vm676, %v669, %v673
          %v678 = vand.u32 2147483647, %v667
          %vm679 = vcmp.eq.f32.partialorder %v678, 8.507059e+37
          %v680 = vand.u32 %v667, 2147483648
          %v681 = vor.u32 1.1754944e-38, %v680
          %v682 = vsel %vm679, %v681, %v677
          %v683 = vmul.f32 %v662, %v682
          %684 = vst [vmem:[%s208] sm:$0xff] %v683
        $region44: #{tpu_custom_call.1} parent=31 // pred_fallthru
          _
        %s685 = sand.u32 %s111, 1
        %s686 = scalar_lea.sflag [#allocation8], %s685
        %s687 = sand.u32 %s111, 1
        %s688 = smul.addr %s687, 8
        %s689 = scalar_lea.vmem [#allocation9], %s688
        // Predicated region
        $region45: #{tpu_custom_call.1} parent=31 // pred_check
          %p690 = pneg %p121
        $region46: #{tpu_custom_call.1} parent=31 // pred_check_branch
          %692 = sbr.rel (%p690) target = $region48
        $region47: #{tpu_custom_call.1} parent=31 // pred_region
          %694 = vsyncadd %s686, 0
          %s695 = smul.addr %s25, 8
          %s696 = scalar_lea.hbm %s3, %s695
          %s698 = sshll.u32 %s689, 4
          %s699 = int_to_ptr.vmem [resolvable:$true] %s698
          %s700 = sshll.u32 %s696, 4
          %s701 = int_to_ptr.hbm [resolvable:$true] %s700
          %703 = dma.vmem_to_hbm [thread:$0]  %s699, 128, %s701, %s686
        $region48: #{tpu_custom_call.1} parent=31 // pred_fallthru
          _
      $region32: #{tpu_custom_call.1} parent=5 // pred_fallthru
        _
      %p704 = scmp.le.s32.totalorder 2, %s16
      // Predicated region
      $region49: #{tpu_custom_call.1} parent=5 // pred_check
        %p705 = pneg %p704
      $region50: #{tpu_custom_call.1} parent=5 // pred_check_branch
        %707 = sbr.rel (%p705) target = $region52
      $region51: #{tpu_custom_call.1} parent=5 // pred_region
        %s708 = ssub.s32 %s16, 2
        // Predicated region
        $region53: #{tpu_custom_call.1} parent=51 // pred_check
          %p709 = pneg %p127
        $region54: #{tpu_custom_call.1} parent=51 // pred_check_branch
          %711 = sbr.rel (%p709) target = $region56
        $region55: #{tpu_custom_call.1} parent=51 // pred_region
          %s712 = sand.u32 %s112, 1
          %s713 = scalar_lea.sflag [#allocation8], %s712
          %s714 = sand.u32 %s112, 1
          %s715 = smul.addr %s714, 8
          %s716 = scalar_lea.vmem [#allocation9], %s715
          %718 = dma.done %s713, 128
        $region56: #{tpu_custom_call.1} parent=51 // pred_fallthru
          _
      $region52: #{tpu_custom_call.1} parent=5 // pred_fallthru
        _
    $region6: #{tpu_custom_call.1} parent=1 // loop_footer
      %s20 = sadd.s32 1, %s16
    $region7: #{tpu_custom_call.1} parent=1 // loop_footer_branch
      %15 = sbr.rel target = $region3
    $region8: #{tpu_custom_call.1} parent=1 // loop_exit
      _
    %719 = vsyncpa [#allocation7], 1
    %s720 = scalar_lea.sflag [#allocation7], 1
    %721 = vsyncpa %s720, 1
    %722 = vsyncpa [#allocation8], 1
    %s723 = scalar_lea.sflag [#allocation8], 1
    %724 = vsyncpa %s723, 1

</llo_original>
